<compile_context>
chip_gen: v5e
topology: v5e:2x2
jax: 0.10.0
libtpu: 0.0.40
codegen_flags: <defaults>
</compile_context>

<pallas_src>
import functools
import math

import jax
import jax.numpy as jnp
import numpy as np
from jax.experimental import pallas as pl
from jax.experimental.pallas import tpu as pltpu

LN_EPS = 1e-5


def _perceiver_attention_kernel(
    xl_ref,    # (B, n1+n2, D)  concat(x, latents) for this batch tile
    lnw_ref,   # (n1+n2, D)     row-packed LayerNorm weight (norm1 rows, then norm2)
    lnb_ref,   # (n1+n2, D)     row-packed LayerNorm bias
    wq_ref,    # (H, D, dh)     to_q weight, head-major, pre-scaled by dim_head**-0.25
    wk_ref,    # (H, D, dh)     k half of to_kv, head-major, pre-scaled
    wv_ref,    # (H, D, dh)     v half of to_kv, head-major
    wo_ref,    # (H, dh, D)     to_out weight, head-major
    out_ref,   # (B, 1, n2*D)   lane-dense output slab
    *, n1, n2, heads, dim_head,
):
    B, N, D = xl_ref.shape
    assert N == n1 + n2
    H, dh = heads, dim_head

    xl = xl_ref[...].astype(jnp.float32)                       # (B, N, D)

    # Fused LayerNorm: rows [0, n1) use norm1 params, rows [n1, N) use norm2 params.
    mu = jnp.mean(xl, axis=-1, keepdims=True)
    var = jnp.mean((xl - mu) ** 2, axis=-1, keepdims=True)
    xln = (xl - mu) * jax.lax.rsqrt(var + LN_EPS) * lnw_ref[...] + lnb_ref[...]

    latn = xln[:, n1:, :]                                       # (B, n2, D)
    xln2 = xln.reshape(B * N, D)                                # layout-preserving
    latn2 = latn.reshape(B * n2, D)

    # Head-batched projections (single batched matmul each; q/k scale folded into
    # the weights, no per-head loop, no lane slicing of activations).
    lat_h = jnp.broadcast_to(latn2[None], (H, B * n2, D))
    x_h = jnp.broadcast_to(xln2[None], (H, B * N, D))
    q = jnp.einsum("hnd,hde->hne", lat_h, wq_ref[...],
                   preferred_element_type=jnp.float32)          # (H, B*n2, dh)
    k = jnp.einsum("hnd,hde->hne", x_h, wk_ref[...],
                   preferred_element_type=jnp.float32)          # (H, B*N, dh)
    v = jnp.einsum("hnd,hde->hne", x_h, wv_ref[...],
                   preferred_element_type=jnp.float32)          # (H, B*N, dh)

    # Merge (head, batch) into one batch dim and run attention as two batched
    # dot_generals with a float32 softmax in between (matches the reference math).
    qg = q.reshape(H * B, n2, dh)
    kg = k.reshape(H * B, N, dh)
    vg = v.reshape(H * B, N, dh)
    s = jnp.einsum("gqd,gkd->gqk", qg, kg,
                   preferred_element_type=jnp.float32)          # (H*B, n2, N)
    p = jax.nn.softmax(s, axis=-1)
    o = jnp.einsum("gqk,gkd->gqd", p, vg,
                   preferred_element_type=jnp.float32)          # (H*B, n2, dh)

    # Output projection, head-batched, then summed over heads (H is small & static).
    oh = o.reshape(H, B * n2, dh)
    outh = jnp.einsum("hnd,hde->hne", oh, wo_ref[...],
                      preferred_element_type=jnp.float32)       # (H, B*n2, D)
    out2 = outh[0]
    for h in range(1, H):
        out2 = out2 + outh[h]                                   # (B*n2, D)

    # Lane-dense store: build a (B, n2*D) slab (n2*D is a multiple of 128) by
    # lane-concatenating the per-query rows, then write it in one dense store.
    out3 = out2.reshape(B, n2, D)
    flat = jnp.concatenate([out3[:, qq, :] for qq in range(n2)], axis=-1)  # (B, n2*D)
    out_ref[:, 0, :] = flat.astype(out_ref.dtype)


def perceiver_attention(x, latents, params, *, heads, dim_head, batch_tile=None):
    """x: (b, n1, D), latents: (b, n2, D) -> (b, n2, D)."""
    b, n1, d = x.shape
    b2, n2, d2 = latents.shape
    assert b == b2 and d == d2
    inner = heads * dim_head
    n = n1 + n2

    # Params in PyTorch nn.Linear layout: weight is (out_features, in_features).
    n1w, n1b, n2w, n2b, wq, wkv, wo = params
    assert wq.shape == (inner, d) and wkv.shape == (2 * inner, d) and wo.shape == (d, inner)

    # ---- one-time parameter repacking (plain JAX ops, outside the kernel) ----
    scale = dim_head ** -0.25  # applied to both q and k in the reference; folded here
    lnw = jnp.concatenate([jnp.broadcast_to(n1w, (n1, d)),
                           jnp.broadcast_to(n2w, (n2, d))], axis=0)        # (n, d)
    lnb = jnp.concatenate([jnp.broadcast_to(n1b, (n1, d)),
                           jnp.broadcast_to(n2b, (n2, d))], axis=0)        # (n, d)
    wq_h = (wq.T * scale).reshape(d, heads, dim_head).transpose(1, 0, 2)    # (H, d, dh)
    wk_h = (wkv[:inner].T * scale).reshape(d, heads, dim_head).transpose(1, 0, 2)
    wv_h = wkv[inner:].T.reshape(d, heads, dim_head).transpose(1, 0, 2)
    wo_h = wo.T.reshape(heads, dim_head, d)                                 # (H, dh, d)

    # Concatenate x and latents once here so the kernel never concatenates.
    xl = jnp.concatenate([x, latents], axis=1)                              # (b, n, d)

    # ---- batch tiling of the grid ----
    # Default: 2 grid steps so both TensorCores on v7x get work, each step still
    # carrying half the batch.  On single-TC v5e/v6e, pass batch_tile=b to collapse
    # to a single fat step (VMEM per step is only ~KBs at these sizes).
    if batch_tile is None:
        batch_tile = b if (b < 2 or b % 2) else b // 2
    assert b % batch_tile == 0
    grid = (b // batch_tile,)

    kernel = functools.partial(_perceiver_attention_kernel,
                               n1=n1, n2=n2, heads=heads, dim_head=dim_head)

    out_flat = pl.pallas_call(
        kernel,
        out_shape=jax.ShapeDtypeStruct((b, 1, n2 * d), x.dtype),
        grid=grid,
        in_specs=[
            pl.BlockSpec((batch_tile, n, d), lambda i: (i, 0, 0)),      # concat(x, latents)
            pl.BlockSpec((n, d), lambda i: (0, 0)),                     # LN weight (resident)
            pl.BlockSpec((n, d), lambda i: (0, 0)),                     # LN bias (resident)
            pl.BlockSpec((heads, d, dim_head), lambda i: (0, 0, 0)),    # wq (head-major)
            pl.BlockSpec((heads, d, dim_head), lambda i: (0, 0, 0)),    # wk
            pl.BlockSpec((heads, d, dim_head), lambda i: (0, 0, 0)),    # wv
            pl.BlockSpec((heads, dim_head, d), lambda i: (0, 0, 0)),    # wo
        ],
        out_specs=pl.BlockSpec((batch_tile, 1, n2 * d), lambda i: (i, 0, 0)),
        compiler_params=pltpu.CompilerParams(dimension_semantics=("parallel",)),
    )(xl, lnw, lnb, wq_h, wk_h, wv_h, wo_h)

    return out_flat.reshape(b, n2, d)


def _reference(x, latents, params, *, heads, dim_head):
    """Plain-JAX reference mirroring the PyTorch forward (PyTorch weight layouts)."""
    n1w, n1b, n2w, n2b, wq, wkv, wo = params
    inner = heads * dim_head

    def ln(t, w, b):
        mu = jnp.mean(t, axis=-1, keepdims=True)
        var = jnp.mean((t - mu) ** 2, axis=-1, keepdims=True)
        return (t - mu) / jnp.sqrt(var + LN_EPS) * w + b

    xn = ln(x, n1w, n1b)
    latn = ln(latents, n2w, n2b)
    bsz, l, _ = latn.shape
    q = latn @ wq.T
    kv_in = jnp.concatenate([xn, latn], axis=-2)
    kv = kv_in @ wkv.T
    k, v = kv[..., :inner], kv[..., inner:]

    def split_heads(t):
        b_, s_, _ = t.shape
        return t.reshape(b_, s_, heads, dim_head).transpose(0, 2, 1, 3)

    q, k, v = split_heads(q), split_heads(k), split_heads(v)
    scale = 1.0 / math.sqrt(math.sqrt(dim_head))
    w = jnp.einsum("bhqd,bhkd->bhqk", q * scale, k * scale)
    w = jax.nn.softmax(w.astype(jnp.float32), axis=-1).astype(w.dtype)
    out = jnp.einsum("bhqk,bhkd->bhqd", w, v)
    out = out.transpose(0, 2, 1, 3).reshape(bsz, l, inner)
    return out @ wo.T


def init_params(key, dim, heads, dim_head):
    inner = heads * dim_head
    ks = jax.random.split(key, 7)
    n1w = 1.0 + 0.1 * jax.random.normal(ks[0], (dim,), jnp.float32)
    n1b = 0.1 * jax.random.normal(ks[1], (dim,), jnp.float32)
    n2w = 1.0 + 0.1 * jax.random.normal(ks[2], (dim,), jnp.float32)
    n2b = 0.1 * jax.random.normal(ks[3], (dim,), jnp.float32)
    # PyTorch nn.Linear weight layout: (out_features, in_features)
    wq = 0.02 * jax.random.normal(ks[4], (inner, dim), jnp.float32)
    wkv = 0.02 * jax.random.normal(ks[5], (2 * inner, dim), jnp.float32)
    wo = 0.02 * jax.random.normal(ks[6], (dim, inner), jnp.float32)
    return (n1w, n1b, n2w, n2b, wq, wkv, wo)


if __name__ == "__main__":
    DIM, HEADS, DIM_HEAD = 32, 4, 8
    b, n1, n2 = 2, 16, 8

    key = jax.random.PRNGKey(0)
    kx, kl, kp = jax.random.split(key, 3)
    x = jax.random.normal(kx, (b, n1, DIM), jnp.float32)
    latents = jax.random.normal(kl, (b, n2, DIM), jnp.float32)
    params = init_params(kp, DIM, HEADS, DIM_HEAD)

    out = perceiver_attention(x, latents, params, heads=HEADS, dim_head=DIM_HEAD)
    out = jax.block_until_ready(out)

    ref = jax.block_until_ready(_reference(x, latents, params, heads=HEADS, dim_head=DIM_HEAD))
    np.testing.assert_allclose(np.asarray(out), np.asarray(ref), rtol=1e-4, atol=1e-5)

    print("KERNEL_OK")
</pallas_src>

<mosaic_0001>
module attributes {stable_mosaic.version = 11 : i64} {
  func.func @_perceiver_attention_kernel(%arg0: i32, %arg1: memref<1x24x32xf32, #tpu.memory_space<vmem>>, %arg2: memref<24x32xf32, #tpu.memory_space<vmem>>, %arg3: memref<24x32xf32, #tpu.memory_space<vmem>>, %arg4: memref<4x32x8xf32, #tpu.memory_space<vmem>>, %arg5: memref<4x32x8xf32, #tpu.memory_space<vmem>>, %arg6: memref<4x32x8xf32, #tpu.memory_space<vmem>>, %arg7: memref<4x8x32xf32, #tpu.memory_space<vmem>>, %arg8: memref<1x1x256xf32, #tpu.memory_space<vmem>>) attributes {dimension_semantics = [#tpu.dimension_semantics<parallel>], iteration_bounds = array<i64: 2>, scalar_prefetch = 0 : i64, scratch_operands = 0 : i64, tpu.core_type = #tpu.core_type<tc>, window_params = [{transform_indices = @transform_0, window_bounds = array<i64: 1, 24, 32>}, {pipeline_mode = #tpu.pipeline_mode<synchronous>, transform_indices = @transform_1, window_bounds = array<i64: 24, 32>}, {pipeline_mode = #tpu.pipeline_mode<synchronous>, transform_indices = @transform_2, window_bounds = array<i64: 24, 32>}, {pipeline_mode = #tpu.pipeline_mode<synchronous>, transform_indices = @transform_3, window_bounds = array<i64: 4, 32, 8>}, {pipeline_mode = #tpu.pipeline_mode<synchronous>, transform_indices = @transform_4, window_bounds = array<i64: 4, 32, 8>}, {pipeline_mode = #tpu.pipeline_mode<synchronous>, transform_indices = @transform_5, window_bounds = array<i64: 4, 32, 8>}, {pipeline_mode = #tpu.pipeline_mode<synchronous>, transform_indices = @transform_6, window_bounds = array<i64: 4, 8, 32>}, {transform_indices = @transform_7, window_bounds = array<i64: 1, 1, 256>}]} {
    %c0 = arith.constant 0 : index
    %c0_0 = arith.constant 0 : index
    %c0_1 = arith.constant 0 : index
    %0 = vector.load %arg1[%c0, %c0_0, %c0_1] : memref<1x24x32xf32, #tpu.memory_space<vmem>>, vector<1x24x32xf32>
    %cst = arith.constant dense<0.000000e+00> : vector<1x24xf32>
    %1 = vector.multi_reduction <add>, %0, %cst [2] : vector<1x24x32xf32> to vector<1x24xf32>
    %2 = vector.shape_cast %1 : vector<1x24xf32> to vector<1x24x1xf32>
    %cst_2 = arith.constant 3.200000e+01 : f32
    %3 = vector.broadcast %cst_2 : f32 to vector<1x24x1xf32>
    %4 = arith.divf %2, %3 : vector<1x24x1xf32>
    %5 = vector.broadcast %4 : vector<1x24x1xf32> to vector<1x24x32xf32>
    %6 = arith.subf %0, %5 : vector<1x24x32xf32>
    %7 = arith.mulf %6, %6 : vector<1x24x32xf32>
    %cst_3 = arith.constant dense<0.000000e+00> : vector<1x24xf32>
    %8 = vector.multi_reduction <add>, %7, %cst_3 [2] : vector<1x24x32xf32> to vector<1x24xf32>
    %9 = vector.shape_cast %8 : vector<1x24xf32> to vector<1x24x1xf32>
    %cst_4 = arith.constant 3.200000e+01 : f32
    %10 = vector.broadcast %cst_4 : f32 to vector<1x24x1xf32>
    %11 = arith.divf %9, %10 : vector<1x24x1xf32>
    %12 = vector.broadcast %4 : vector<1x24x1xf32> to vector<1x24x32xf32>
    %13 = arith.subf %0, %12 : vector<1x24x32xf32>
    %cst_5 = arith.constant 9.99999974E-6 : f32
    %14 = vector.broadcast %cst_5 : f32 to vector<1x24x1xf32>
    %15 = arith.addf %11, %14 : vector<1x24x1xf32>
    %16 = math.rsqrt %15 : vector<1x24x1xf32>
    %17 = vector.broadcast %16 : vector<1x24x1xf32> to vector<1x24x32xf32>
    %18 = arith.mulf %13, %17 : vector<1x24x32xf32>
    %c0_6 = arith.constant 0 : index
    %c0_7 = arith.constant 0 : index
    %19 = vector.load %arg2[%c0_6, %c0_7] : memref<24x32xf32, #tpu.memory_space<vmem>>, vector<24x32xf32>
    %20 = vector.shape_cast %19 : vector<24x32xf32> to vector<1x24x32xf32>
    %21 = arith.mulf %18, %20 : vector<1x24x32xf32>
    %c0_8 = arith.constant 0 : index
    %c0_9 = arith.constant 0 : index
    %22 = vector.load %arg3[%c0_8, %c0_9] : memref<24x32xf32, #tpu.memory_space<vmem>>, vector<24x32xf32>
    %23 = vector.shape_cast %22 : vector<24x32xf32> to vector<1x24x32xf32>
    %24 = arith.addf %21, %23 : vector<1x24x32xf32>
    %25 = vector.extract_strided_slice %24 {offsets = [0, 16, 0], sizes = [1, 8, 32], strides = [1, 1, 1]} : vector<1x24x32xf32> to vector<1x8x32xf32>
    %26 = vector.shape_cast %24 : vector<1x24x32xf32> to vector<24x32xf32>
    %27 = vector.shape_cast %25 : vector<1x8x32xf32> to vector<8x32xf32>
    %28 = vector.shape_cast %27 : vector<8x32xf32> to vector<1x8x32xf32>
    %29 = vector.shape_cast %28 : vector<1x8x32xf32> to vector<1x8x32xf32>
    %30 = vector.broadcast %29 : vector<1x8x32xf32> to vector<4x8x32xf32>
    %31 = vector.shape_cast %26 : vector<24x32xf32> to vector<1x24x32xf32>
    %32 = vector.shape_cast %31 : vector<1x24x32xf32> to vector<1x24x32xf32>
    %33 = vector.broadcast %32 : vector<1x24x32xf32> to vector<4x24x32xf32>
    %c0_10 = arith.constant 0 : index
    %c0_11 = arith.constant 0 : index
    %c0_12 = arith.constant 0 : index
    %34 = vector.load %arg4[%c0_10, %c0_11, %c0_12] : memref<4x32x8xf32, #tpu.memory_space<vmem>>, vector<4x32x8xf32>
    "tpu.trace_start"() <{level = 10 : i32, message = "hnd,hde->hne"}> : () -> ()
    %cst_13 = arith.constant dense<0.000000e+00> : vector<4x8x8xf32>
    %35 = tpu.matmul %30, %34, %cst_13 {dimension_numbers = #tpu.dot_dimension_numbers<[2], [1], [1], [2], [0, 0, 0, 1, 1, 2], [0], [0]>} : vector<4x8x32xf32>, vector<4x32x8xf32>, vector<4x8x8xf32> -> vector<4x8x8xf32>
    "tpu.trace_stop"() : () -> ()
    %c0_14 = arith.constant 0 : index
    %c0_15 = arith.constant 0 : index
    %c0_16 = arith.constant 0 : index
    %36 = vector.load %arg5[%c0_14, %c0_15, %c0_16] : memref<4x32x8xf32, #tpu.memory_space<vmem>>, vector<4x32x8xf32>
    "tpu.trace_start"() <{level = 10 : i32, message = "hnd,hde->hne"}> : () -> ()
    %cst_17 = arith.constant dense<0.000000e+00> : vector<4x24x8xf32>
    %37 = tpu.matmul %33, %36, %cst_17 {dimension_numbers = #tpu.dot_dimension_numbers<[2], [1], [1], [2], [0, 0, 0, 1, 1, 2], [0], [0]>} : vector<4x24x32xf32>, vector<4x32x8xf32>, vector<4x24x8xf32> -> vector<4x24x8xf32>
    "tpu.trace_stop"() : () -> ()
    %c0_18 = arith.constant 0 : index
    %c0_19 = arith.constant 0 : index
    %c0_20 = arith.constant 0 : index
    %38 = vector.load %arg6[%c0_18, %c0_19, %c0_20] : memref<4x32x8xf32, #tpu.memory_space<vmem>>, vector<4x32x8xf32>
    "tpu.trace_start"() <{level = 10 : i32, message = "hnd,hde->hne"}> : () -> ()
    %cst_21 = arith.constant dense<0.000000e+00> : vector<4x24x8xf32>
    %39 = tpu.matmul %33, %38, %cst_21 {dimension_numbers = #tpu.dot_dimension_numbers<[2], [1], [1], [2], [0, 0, 0, 1, 1, 2], [0], [0]>} : vector<4x24x32xf32>, vector<4x32x8xf32>, vector<4x24x8xf32> -> vector<4x24x8xf32>
    "tpu.trace_stop"() : () -> ()
    "tpu.trace_start"() <{level = 10 : i32, message = "gqd,gkd->gqk"}> : () -> ()
    %cst_22 = arith.constant dense<0.000000e+00> : vector<4x8x24xf32>
    %40 = tpu.matmul %35, %37, %cst_22 {dimension_numbers = #tpu.dot_dimension_numbers<[2], [2], [1], [1], [0, 0, 0, 1, 1, 1], [0], [0]>} : vector<4x8x8xf32>, vector<4x24x8xf32>, vector<4x8x24xf32> -> vector<4x8x24xf32>
    "tpu.trace_stop"() : () -> ()
    %cst_23 = arith.constant dense<0xFF800000> : vector<4x8xf32>
    %41 = vector.multi_reduction <maximumf>, %40, %cst_23 [2] : vector<4x8x24xf32> to vector<4x8xf32>
    %cst_24 = arith.constant 0xFF800000 : f32
    %42 = vector.broadcast %cst_24 : f32 to vector<4x8xf32>
    %43 = arith.maximumf %42, %41 : vector<4x8xf32>
    %44 = vector.shape_cast %43 : vector<4x8xf32> to vector<4x8x1xf32>
    %45 = vector.broadcast %44 : vector<4x8x1xf32> to vector<4x8x24xf32>
    %46 = arith.subf %40, %45 : vector<4x8x24xf32>
    %47 = math.exp %46 : vector<4x8x24xf32>
    %cst_25 = arith.constant dense<0.000000e+00> : vector<4x8xf32>
    %48 = vector.multi_reduction <add>, %47, %cst_25 [2] : vector<4x8x24xf32> to vector<4x8xf32>
    %49 = vector.shape_cast %48 : vector<4x8xf32> to vector<4x8x1xf32>
    %50 = vector.broadcast %49 : vector<4x8x1xf32> to vector<4x8x24xf32>
    %51 = arith.divf %47, %50 : vector<4x8x24xf32>
    "tpu.trace_start"() <{level = 10 : i32, message = "gqk,gkd->gqd"}> : () -> ()
    %cst_26 = arith.constant dense<0.000000e+00> : vector<4x8x8xf32>
    %52 = tpu.matmul %51, %39, %cst_26 {dimension_numbers = #tpu.dot_dimension_numbers<[2], [1], [1], [2], [0, 0, 0, 1, 1, 2], [0], [0]>} : vector<4x8x24xf32>, vector<4x24x8xf32>, vector<4x8x8xf32> -> vector<4x8x8xf32>
    "tpu.trace_stop"() : () -> ()
    %c0_27 = arith.constant 0 : index
    %c0_28 = arith.constant 0 : index
    %c0_29 = arith.constant 0 : index
    %53 = vector.load %arg7[%c0_27, %c0_28, %c0_29] : memref<4x8x32xf32, #tpu.memory_space<vmem>>, vector<4x8x32xf32>
    "tpu.trace_start"() <{level = 10 : i32, message = "hnd,hde->hne"}> : () -> ()
    %cst_30 = arith.constant dense<0.000000e+00> : vector<4x8x32xf32>
    %54 = tpu.matmul %52, %53, %cst_30 {dimension_numbers = #tpu.dot_dimension_numbers<[2], [1], [1], [2], [0, 0, 0, 1, 1, 2], [0], [0]>} : vector<4x8x8xf32>, vector<4x8x32xf32>, vector<4x8x32xf32> -> vector<4x8x32xf32>
    "tpu.trace_stop"() : () -> ()
    %55 = vector.extract_strided_slice %54 {offsets = [0, 0, 0], sizes = [1, 8, 32], strides = [1, 1, 1]} : vector<4x8x32xf32> to vector<1x8x32xf32>
    %56 = vector.shape_cast %55 : vector<1x8x32xf32> to vector<8x32xf32>
    %57 = vector.extract_strided_slice %54 {offsets = [1, 0, 0], sizes = [1, 8, 32], strides = [1, 1, 1]} : vector<4x8x32xf32> to vector<1x8x32xf32>
    %58 = vector.shape_cast %57 : vector<1x8x32xf32> to vector<8x32xf32>
    %59 = arith.addf %56, %58 : vector<8x32xf32>
    %60 = vector.extract_strided_slice %54 {offsets = [2, 0, 0], sizes = [1, 8, 32], strides = [1, 1, 1]} : vector<4x8x32xf32> to vector<1x8x32xf32>
    %61 = vector.shape_cast %60 : vector<1x8x32xf32> to vector<8x32xf32>
    %62 = arith.addf %59, %61 : vector<8x32xf32>
    %63 = vector.extract_strided_slice %54 {offsets = [3, 0, 0], sizes = [1, 8, 32], strides = [1, 1, 1]} : vector<4x8x32xf32> to vector<1x8x32xf32>
    %64 = vector.shape_cast %63 : vector<1x8x32xf32> to vector<8x32xf32>
    %65 = arith.addf %62, %64 : vector<8x32xf32>
    %66 = vector.shape_cast %65 : vector<8x32xf32> to vector<1x8x32xf32>
    %67 = vector.extract_strided_slice %66 {offsets = [0, 0, 0], sizes = [1, 1, 32], strides = [1, 1, 1]} : vector<1x8x32xf32> to vector<1x1x32xf32>
    %68 = vector.shape_cast %67 : vector<1x1x32xf32> to vector<1x32xf32>
    %69 = vector.extract_strided_slice %66 {offsets = [0, 1, 0], sizes = [1, 1, 32], strides = [1, 1, 1]} : vector<1x8x32xf32> to vector<1x1x32xf32>
    %70 = vector.shape_cast %69 : vector<1x1x32xf32> to vector<1x32xf32>
    %71 = vector.extract_strided_slice %66 {offsets = [0, 2, 0], sizes = [1, 1, 32], strides = [1, 1, 1]} : vector<1x8x32xf32> to vector<1x1x32xf32>
    %72 = vector.shape_cast %71 : vector<1x1x32xf32> to vector<1x32xf32>
    %73 = vector.extract_strided_slice %66 {offsets = [0, 3, 0], sizes = [1, 1, 32], strides = [1, 1, 1]} : vector<1x8x32xf32> to vector<1x1x32xf32>
    %74 = vector.shape_cast %73 : vector<1x1x32xf32> to vector<1x32xf32>
    %75 = vector.extract_strided_slice %66 {offsets = [0, 4, 0], sizes = [1, 1, 32], strides = [1, 1, 1]} : vector<1x8x32xf32> to vector<1x1x32xf32>
    %76 = vector.shape_cast %75 : vector<1x1x32xf32> to vector<1x32xf32>
    %77 = vector.extract_strided_slice %66 {offsets = [0, 5, 0], sizes = [1, 1, 32], strides = [1, 1, 1]} : vector<1x8x32xf32> to vector<1x1x32xf32>
    %78 = vector.shape_cast %77 : vector<1x1x32xf32> to vector<1x32xf32>
    %79 = vector.extract_strided_slice %66 {offsets = [0, 6, 0], sizes = [1, 1, 32], strides = [1, 1, 1]} : vector<1x8x32xf32> to vector<1x1x32xf32>
    %80 = vector.shape_cast %79 : vector<1x1x32xf32> to vector<1x32xf32>
    %81 = vector.extract_strided_slice %66 {offsets = [0, 7, 0], sizes = [1, 1, 32], strides = [1, 1, 1]} : vector<1x8x32xf32> to vector<1x1x32xf32>
    %82 = vector.shape_cast %81 : vector<1x1x32xf32> to vector<1x32xf32>
    %83 = tpu.concatenate %68, %70, %72, %74, %76, %78, %80, %82 in 1 : vector<1x32xf32>, vector<1x32xf32>, vector<1x32xf32>, vector<1x32xf32>, vector<1x32xf32>, vector<1x32xf32>, vector<1x32xf32>, vector<1x32xf32> -> vector<1x256xf32>
    %c0_31 = arith.constant 0 : index
    %c0_32 = arith.constant 0 : index
    %c0_33 = arith.constant 0 : index
    %84 = vector.load %arg8[%c0_31, %c0_32, %c0_33] : memref<1x1x256xf32, #tpu.memory_space<vmem>>, vector<1x1x256xf32>
    %85 = vector.shape_cast %84 : vector<1x1x256xf32> to vector<1x256xf32>
    %86 = vector.shape_cast %83 : vector<1x256xf32> to vector<1x1x256xf32>
    tpu.vector_store %arg8[%c0_31, %c0_32, %c0_33], %86 {strides = array<i32>} : memref<1x1x256xf32, #tpu.memory_space<vmem>>, vector<1x1x256xf32>,
    return
  }
  func.func @transform_0(%arg0: i32) -> (i32, i32, i32) {
    %c0_i32 = arith.constant 0 : i32
    %c0_i32_0 = arith.constant 0 : i32
    %c0_i32_1 = arith.constant 0 : i32
    return %arg0, %c0_i32, %c0_i32_0 : i32, i32, i32
  }
  func.func @transform_1(%arg0: i32) -> (i32, i32) {
    %c0_i32 = arith.constant 0 : i32
    %c0_i32_0 = arith.constant 0 : i32
    %c0_i32_1 = arith.constant 0 : i32
    return %c0_i32, %c0_i32_0 : i32, i32
  }
  func.func @transform_2(%arg0: i32) -> (i32, i32) {
    %c0_i32 = arith.constant 0 : i32
    %c0_i32_0 = arith.constant 0 : i32
    %c0_i32_1 = arith.constant 0 : i32
    return %c0_i32, %c0_i32_0 : i32, i32
  }
  func.func @transform_3(%arg0: i32) -> (i32, i32, i32) {
    %c0_i32 = arith.constant 0 : i32
    %c0_i32_0 = arith.constant 0 : i32
    %c0_i32_1 = arith.constant 0 : i32
    %c0_i32_2 = arith.constant 0 : i32
    return %c0_i32, %c0_i32_0, %c0_i32_1 : i32, i32, i32
  }
  func.func @transform_4(%arg0: i32) -> (i32, i32, i32) {
    %c0_i32 = arith.constant 0 : i32
    %c0_i32_0 = arith.constant 0 : i32
    %c0_i32_1 = arith.constant 0 : i32
    %c0_i32_2 = arith.constant 0 : i32
    return %c0_i32, %c0_i32_0, %c0_i32_1 : i32, i32, i32
  }
  func.func @transform_5(%arg0: i32) -> (i32, i32, i32) {
    %c0_i32 = arith.constant 0 : i32
    %c0_i32_0 = arith.constant 0 : i32
    %c0_i32_1 = arith.constant 0 : i32
    %c0_i32_2 = arith.constant 0 : i32
    return %c0_i32, %c0_i32_0, %c0_i32_1 : i32, i32, i32
  }
  func.func @transform_6(%arg0: i32) -> (i32, i32, i32) {
    %c0_i32 = arith.constant 0 : i32
    %c0_i32_0 = arith.constant 0 : i32
    %c0_i32_1 = arith.constant 0 : i32
    %c0_i32_2 = arith.constant 0 : i32
    return %c0_i32, %c0_i32_0, %c0_i32_1 : i32, i32, i32
  }
  func.func @transform_7(%arg0: i32) -> (i32, i32, i32) {
    %c0_i32 = arith.constant 0 : i32
    %c0_i32_0 = arith.constant 0 : i32
    %c0_i32_1 = arith.constant 0 : i32
    return %arg0, %c0_i32, %c0_i32_0 : i32, i32, i32
  }
}

</mosaic_0001>

<llo_original>
// kernel: tpu_custom_call.1
$region0: #{tpu_custom_call.1}
  #allocation0 [shape = 'u32[]', space=smem, size = 0x4, offset = 0x4, fixed_abs, tag = 'smem constant byte address 0x4 - core index']
  #allocation1 [shape = 'u32[72,128]{1,0:T(1,128)}', space=vmem, size = 0x9000, scoped, tag = 'internal scratch']
  %s0 = inlined_call_operand.vmem [shape: f32[2,24,32], index: 0, kind: input, shape index: {}]
  %s1 = inlined_call_operand.vmem [shape: f32[24,32], index: 1, kind: input, shape index: {}]
  %s2 = inlined_call_operand.vmem [shape: f32[24,32], index: 2, kind: input, shape index: {}]
  %s3 = inlined_call_operand.vmem [shape: f32[4,32,8], index: 3, kind: input, shape index: {}]
  %s4 = inlined_call_operand.vmem [shape: f32[4,32,8], index: 4, kind: input, shape index: {}]
  %s5 = inlined_call_operand.vmem [shape: f32[4,32,8], index: 5, kind: input, shape index: {}]
  %s6 = inlined_call_operand.vmem [shape: f32[4,8,32], index: 6, kind: input, shape index: {}]
  %s7 = inlined_call_operand.hbm [shape: f32[2,1,256], index: 7, kind: output, shape index: {}]
  %s8 = sld [smem:[#allocation0]]
  $region61: #{tpu_custom_call.1} parent=0
    _
  %s10 = ssub.s32 1, %s8
  %s11 = scalar_select 0, %s10, %s8
  $region1: #{tpu_custom_call.1} parent=0
    #allocation2 [shape = 'u8[2048]{0}', space=vmem, size = 0x800, scoped, tag = 'output window, operand 0']
    #allocation3 [shape = 's32[2]{0}', space=sflag, size = 0x8, scoped, tag = 'scoped memory for tpu_custom_call.1']
    %12 = vsyncpa [#allocation3], 0
    %s13 = scalar_lea.sflag [#allocation3], 1
    %14 = vsyncpa %s13, 0
    loop: start=0, step=1, limit=4
    $region2: #{tpu_custom_call.1} parent=1 // loop_pre_header
      _
    $region3: #{tpu_custom_call.1} parent=1 // loop_header
      %s16 = sphi 0, %s20
      %p17 = scmp.ge.s32.totalorder %s16, 4
      %s26 = sphi 0, %s28
      %s29 = sphi 0, %s26
      %s30 = sphi 0, %s29
      %s46 = sphi 0, %s30
      %s50 = sphi 0, %s50
      %s52 = sphi 0, %s50
      %s53 = sphi 0, %s52
      %s67 = sphi 0, %s53
      %s71 = sphi 0, %s71
      %s73 = sphi 0, %s71
      %s74 = sphi 0, %s73
      %s88 = sphi 0, %s74
      %s92 = sphi 0, %s92
      %s94 = sphi 0, %s92
      %s95 = sphi 0, %s94
      %s109 = sphi 0, %s95
      %s113 = sphi 0, %s113
      %s115 = sphi 0, %s113
      %s116 = sphi 0, %s115
      %s130 = sphi 0, %s116
      %s134 = sphi 0, %s134
      %s136 = sphi 0, %s134
      %s137 = sphi 0, %s136
      %s151 = sphi 0, %s137
      %s155 = sphi 0, %s155
      %s157 = sphi 0, %s155
      %s158 = sphi 0, %s157
      %s172 = sphi 0, %s158
      %s178 = sphi 0, %s180
      %s181 = sphi 0, %s178
      %s182 = sphi 0, %s181
      %s198 = sphi 0, %s182
    $region4: #{tpu_custom_call.1} parent=1 // loop_header_branch
      %19 = sbr.rel (%p17) target = $region8
    $region5: #{tpu_custom_call.1} parent=1 // loop_body
      %s21 = ssub.s32 %s16, 1
      %s22 = ssub.s32 %s16, 2
      %s23 = sadd.s32 %s16, 1
      %s24 = ssub.s32 %s16, %s23
      %p25 = scmp.eq.s32.totalorder %s24, 0
      %s27 = sadd.s32 %s26, 1
      %s28 = scalar_select %p25, %s26, %s27
      %p31 = pneg %p25
      %p32 = scmp.eq.s32.totalorder %s16, 1
      %p33 = por %p31, %p32
      %p34 = scmp.ne.s32.totalorder %s26, %s29
      %p35 = scmp.eq.s32.totalorder %s16, 0
      %p36 = por %p34, %p35
      %p37 = scmp.ne.s32.totalorder %s26, %s29
      %p38 = scmp.eq.s32.totalorder %s21, 1
      %p39 = por %p37, %p38
      %p40 = scmp.ne.s32.totalorder %s29, %s30
      %p41 = scmp.eq.s32.totalorder %s21, 0
      %p42 = por %p40, %p41
      %p43 = scmp.ne.s32.totalorder %s29, %s30
      %p44 = scmp.eq.s32.totalorder %s22, 1
      %p45 = por %p43, %p44
      %p47 = scmp.ne.s32.totalorder %s30, %s46
      %p48 = scmp.eq.s32.totalorder %s22, 0
      %p49 = por %p47, %p48
      %s51 = sadd.s32 %s50, 1
      %p54 = scmp.eq.s32.totalorder %s16, 1
      %p55 = scmp.ne.s32.totalorder %s50, %s52
      %p56 = scmp.eq.s32.totalorder %s16, 0
      %p57 = por %p55, %p56
      %p58 = scmp.ne.s32.totalorder %s50, %s52
      %p59 = scmp.eq.s32.totalorder %s21, 1
      %p60 = por %p58, %p59
      %p61 = scmp.ne.s32.totalorder %s52, %s53
      %p62 = scmp.eq.s32.totalorder %s21, 0
      %p63 = por %p61, %p62
      %p64 = scmp.ne.s32.totalorder %s52, %s53
      %p65 = scmp.eq.s32.totalorder %s22, 1
      %p66 = por %p64, %p65
      %p68 = scmp.ne.s32.totalorder %s53, %s67
      %p69 = scmp.eq.s32.totalorder %s22, 0
      %p70 = por %p68, %p69
      %s72 = sadd.s32 %s71, 1
      %p75 = scmp.eq.s32.totalorder %s16, 1
      %p76 = scmp.ne.s32.totalorder %s71, %s73
      %p77 = scmp.eq.s32.totalorder %s16, 0
      %p78 = por %p76, %p77
      %p79 = scmp.ne.s32.totalorder %s71, %s73
      %p80 = scmp.eq.s32.totalorder %s21, 1
      %p81 = por %p79, %p80
      %p82 = scmp.ne.s32.totalorder %s73, %s74
      %p83 = scmp.eq.s32.totalorder %s21, 0
      %p84 = por %p82, %p83
      %p85 = scmp.ne.s32.totalorder %s73, %s74
      %p86 = scmp.eq.s32.totalorder %s22, 1
      %p87 = por %p85, %p86
      %p89 = scmp.ne.s32.totalorder %s74, %s88
      %p90 = scmp.eq.s32.totalorder %s22, 0
      %p91 = por %p89, %p90
      %s93 = sadd.s32 %s92, 1
      %p96 = scmp.eq.s32.totalorder %s16, 1
      %p97 = scmp.ne.s32.totalorder %s92, %s94
      %p98 = scmp.eq.s32.totalorder %s16, 0
      %p99 = por %p97, %p98
      %p100 = scmp.ne.s32.totalorder %s92, %s94
      %p101 = scmp.eq.s32.totalorder %s21, 1
      %p102 = por %p100, %p101
      %p103 = scmp.ne.s32.totalorder %s94, %s95
      %p104 = scmp.eq.s32.totalorder %s21, 0
      %p105 = por %p103, %p104
      %p106 = scmp.ne.s32.totalorder %s94, %s95
      %p107 = scmp.eq.s32.totalorder %s22, 1
      %p108 = por %p106, %p107
      %p110 = scmp.ne.s32.totalorder %s95, %s109
      %p111 = scmp.eq.s32.totalorder %s22, 0
      %p112 = por %p110, %p111
      %s114 = sadd.s32 %s113, 1
      %p117 = scmp.eq.s32.totalorder %s16, 1
      %p118 = scmp.ne.s32.totalorder %s113, %s115
      %p119 = scmp.eq.s32.totalorder %s16, 0
      %p120 = por %p118, %p119
      %p121 = scmp.ne.s32.totalorder %s113, %s115
      %p122 = scmp.eq.s32.totalorder %s21, 1
      %p123 = por %p121, %p122
      %p124 = scmp.ne.s32.totalorder %s115, %s116
      %p125 = scmp.eq.s32.totalorder %s21, 0
      %p126 = por %p124, %p125
      %p127 = scmp.ne.s32.totalorder %s115, %s116
      %p128 = scmp.eq.s32.totalorder %s22, 1
      %p129 = por %p127, %p128
      %p131 = scmp.ne.s32.totalorder %s116, %s130
      %p132 = scmp.eq.s32.totalorder %s22, 0
      %p133 = por %p131, %p132
      %s135 = sadd.s32 %s134, 1
      %p138 = scmp.eq.s32.totalorder %s16, 1
      %p139 = scmp.ne.s32.totalorder %s134, %s136
      %p140 = scmp.eq.s32.totalorder %s16, 0
      %p141 = por %p139, %p140
      %p142 = scmp.ne.s32.totalorder %s134, %s136
      %p143 = scmp.eq.s32.totalorder %s21, 1
      %p144 = por %p142, %p143
      %p145 = scmp.ne.s32.totalorder %s136, %s137
      %p146 = scmp.eq.s32.totalorder %s21, 0
      %p147 = por %p145, %p146
      %p148 = scmp.ne.s32.totalorder %s136, %s137
      %p149 = scmp.eq.s32.totalorder %s22, 1
      %p150 = por %p148, %p149
      %p152 = scmp.ne.s32.totalorder %s137, %s151
      %p153 = scmp.eq.s32.totalorder %s22, 0
      %p154 = por %p152, %p153
      %s156 = sadd.s32 %s155, 1
      %p159 = scmp.eq.s32.totalorder %s16, 1
      %p160 = scmp.ne.s32.totalorder %s155, %s157
      %p161 = scmp.eq.s32.totalorder %s16, 0
      %p162 = por %p160, %p161
      %p163 = scmp.ne.s32.totalorder %s155, %s157
      %p164 = scmp.eq.s32.totalorder %s21, 1
      %p165 = por %p163, %p164
      %p166 = scmp.ne.s32.totalorder %s157, %s158
      %p167 = scmp.eq.s32.totalorder %s21, 0
      %p168 = por %p166, %p167
      %p169 = scmp.ne.s32.totalorder %s157, %s158
      %p170 = scmp.eq.s32.totalorder %s22, 1
      %p171 = por %p169, %p170
      %p173 = scmp.ne.s32.totalorder %s158, %s172
      %p174 = scmp.eq.s32.totalorder %s22, 0
      %p175 = por %p173, %p174
      %s176 = ssub.s32 %s16, %s23
      %p177 = scmp.eq.s32.totalorder %s176, 0
      %s179 = sadd.s32 %s178, 1
      %s180 = scalar_select %p177, %s178, %s179
      %p183 = pneg %p177
      %p184 = scmp.eq.s32.totalorder %s16, 1
      %p185 = por %p183, %p184
      %p186 = scmp.ne.s32.totalorder %s178, %s181
      %p187 = scmp.eq.s32.totalorder %s16, 0
      %p188 = por %p186, %p187
      %p189 = scmp.ne.s32.totalorder %s178, %s181
      %p190 = scmp.eq.s32.totalorder %s21, 1
      %p191 = por %p189, %p190
      %p192 = scmp.ne.s32.totalorder %s181, %s182
      %p193 = scmp.eq.s32.totalorder %s21, 0
      %p194 = por %p192, %p193
      %p195 = scmp.ne.s32.totalorder %s181, %s182
      %p196 = scmp.eq.s32.totalorder %s22, 1
      %p197 = por %p195, %p196
      %p199 = scmp.ne.s32.totalorder %s182, %s198
      %p200 = scmp.eq.s32.totalorder %s22, 0
      %p201 = por %p199, %p200
      %p202 = scmp.le.s32.totalorder 1, %s16
      %p203 = scmp.lt.s32.totalorder %s16, 3
      %p204 = pnand %p202, %p203
      %p205 = pneg %p204
      // Predicated region
      $region9: #{tpu_custom_call.1} parent=5 // pred_check
        _
      $region10: #{tpu_custom_call.1} parent=5 // pred_check_branch
        %207 = sbr.rel (%p204) target = $region12
      $region11: #{tpu_custom_call.1} parent=5 // pred_region
        %s208 = ssub.s32 %s16, 1
        // Predicated region
        $region13: #{tpu_custom_call.1} parent=11 // pred_check
          %p209 = pneg %p63
        $region14: #{tpu_custom_call.1} parent=11 // pred_check_branch
          %211 = sbr.rel (%p209) target = $region16
        $region15: #{tpu_custom_call.1} parent=11 // pred_region
          _
        $region16: #{tpu_custom_call.1} parent=11 // pred_fallthru
          _
        // Predicated region
        $region17: #{tpu_custom_call.1} parent=11 // pred_check
          %p212 = pneg %p84
        $region18: #{tpu_custom_call.1} parent=11 // pred_check_branch
          %214 = sbr.rel (%p212) target = $region20
        $region19: #{tpu_custom_call.1} parent=11 // pred_region
          _
        $region20: #{tpu_custom_call.1} parent=11 // pred_fallthru
          _
        // Predicated region
        $region21: #{tpu_custom_call.1} parent=11 // pred_check
          %p215 = pneg %p105
        $region22: #{tpu_custom_call.1} parent=11 // pred_check_branch
          %217 = sbr.rel (%p215) target = $region24
        $region23: #{tpu_custom_call.1} parent=11 // pred_region
          _
        $region24: #{tpu_custom_call.1} parent=11 // pred_fallthru
          _
        // Predicated region
        $region25: #{tpu_custom_call.1} parent=11 // pred_check
          %p218 = pneg %p126
        $region26: #{tpu_custom_call.1} parent=11 // pred_check_branch
          %220 = sbr.rel (%p218) target = $region28
        $region27: #{tpu_custom_call.1} parent=11 // pred_region
          _
        $region28: #{tpu_custom_call.1} parent=11 // pred_fallthru
          _
        // Predicated region
        $region29: #{tpu_custom_call.1} parent=11 // pred_check
          %p221 = pneg %p147
        $region30: #{tpu_custom_call.1} parent=11 // pred_check_branch
          %223 = sbr.rel (%p221) target = $region32
        $region31: #{tpu_custom_call.1} parent=11 // pred_region
          _
        $region32: #{tpu_custom_call.1} parent=11 // pred_fallthru
          _
        // Predicated region
        $region33: #{tpu_custom_call.1} parent=11 // pred_check
          %p224 = pneg %p168
        $region34: #{tpu_custom_call.1} parent=11 // pred_check_branch
          %226 = sbr.rel (%p224) target = $region36
        $region35: #{tpu_custom_call.1} parent=11 // pred_region
          _
        $region36: #{tpu_custom_call.1} parent=11 // pred_fallthru
          _
      $region12: #{tpu_custom_call.1} parent=5 // pred_fallthru
        _
      %p227 = scmp.lt.s32.totalorder %s16, 2
      // Predicated region
      $region37: #{tpu_custom_call.1} parent=5 // pred_check
        %p228 = pneg %p227
      $region38: #{tpu_custom_call.1} parent=5 // pred_check_branch
        %230 = sbr.rel (%p228) target = $region40
      $region39: #{tpu_custom_call.1} parent=5 // pred_region
        // Predicated region
        $region41: #{tpu_custom_call.1} parent=39 // pred_check
          %p231 = pneg %p36
        $region42: #{tpu_custom_call.1} parent=39 // pred_check_branch
          %233 = sbr.rel (%p231) target = $region44
        $region43: #{tpu_custom_call.1} parent=39 // pred_region
          %p234 = scmp.lt.s32.totalorder %s16, 1
          %s235 = scalar_select %p234, %s16, 1
          %s236 = smul.addr %s235, 3
          %s237 = smul.addr %s236, 8
          %s238 = scalar_lea.vmem %s0, %s237
        $region44: #{tpu_custom_call.1} parent=39 // pred_fallthru
          _
      $region40: #{tpu_custom_call.1} parent=5 // pred_fallthru
        _
      %p239 = scmp.le.s32.totalorder 1, %s16
      %p240 = scmp.lt.s32.totalorder %s16, 3
      %p241 = pnand %p239, %p240
      %p242 = pneg %p241
      // Predicated region
      $region45: #{tpu_custom_call.1} parent=5 // pred_check
        _
      $region46: #{tpu_custom_call.1} parent=5 // pred_check_branch
        %244 = sbr.rel (%p241) target = $region48
      $region47: #{tpu_custom_call.1} parent=5 // pred_region
        %s245 = ssub.s32 %s16, 1
        %p246 = scmp.lt.s32.totalorder %s21, 1
        %s247 = scalar_select %p246, %s21, 1
        %s248 = smul.addr %s247, 3
        %s249 = smul.addr %s248, 8
        %s250 = scalar_lea.vmem %s0, %s249
        %p251 = pneg %p42
        %p252 = pneg %p39
        %p253 = pneg %p63
        %p254 = pneg %p60
        %p255 = pneg %p84
        %p256 = pneg %p81
        %p257 = pneg %p105
        %p258 = pneg %p102
        %p259 = pneg %p126
        %p260 = pneg %p123
        %p261 = pneg %p147
        %p262 = pneg %p144
        %p263 = pneg %p168
        %p264 = pneg %p165
        %p265 = pneg %p194
        %p266 = pneg %p191
        %s267 = sand.u32 %s181, 1
        %s268 = scalar_lea.sflag [#allocation3], %s267
        %s269 = sand.u32 %s181, 1
        %s270 = smul.addr %s269, 2
        %s271 = scalar_lea.vmem [#allocation2], %s270
        %p272 = scmp.lt.s32.totalorder %s21, 1
        %s273 = scalar_select %p272, %s21, 1
        %s274 = smul.addr %s273, 3
        %s275 = smul.addr %s274, 8
        %s276 = scalar_lea.vmem %s0, %s275
        %v277 = vld [vmem:[%s276] sm:$0xff]
        %v278 = vld [vmem:[%s276 + $0x8] sm:$0xff]
        %v279 = vld [vmem:[%s276 + $0x10] sm:$0xff]
        %vm280 = vcmask 261120
        %v281 = vsel %vm280, %v277, 0.0
        %282 = vadd.xlane.f32.xlu0 %v281
        %v283 = vpop.xlane.xlu0 %282
        %v284 = vsel %vm280, %v278, 0.0
        %285 = vadd.xlane.f32.xlu0 %v284
        %v286 = vpop.xlane.xlu0 %285
        %v287 = vsel %vm280, %v279, 0.0
        %288 = vadd.xlane.f32.xlu0 %v287
        %v289 = vpop.xlane.xlu0 %288
        %v290 = vrcp.pop 32.0
        %v291 = vmul.f32 32.0, %v290
        %v292 = vsub.f32 1.0, %v291
        %v293 = vmul.f32 %v290, %v292
        %v294 = vadd.f32 %v290, %v293
        %vm295 = vweird.f32 %v290
        %v296 = vsel %vm295, %v290, %v294
        %v297 = vmul.f32 %v283, %v296
        %v298 = vmul.f32 %v286, %v296
        %v299 = vmul.f32 %v289, %v296
        %v300 = vsub.f32 %v277, %v297
        %v301 = vsub.f32 %v278, %v298
        %v302 = vsub.f32 %v279, %v299
        %v303 = vmul.f32 %v300, %v300
        %v304 = vmul.f32 %v301, %v301
        %v305 = vmul.f32 %v302, %v302
        %v306 = vsel %vm280, %v303, 0.0
        %307 = vadd.xlane.f32.xlu0 %v306
        %v308 = vpop.xlane.xlu0 %307
        %v309 = vsel %vm280, %v304, 0.0
        %310 = vadd.xlane.f32.xlu0 %v309
        %v311 = vpop.xlane.xlu0 %310
        %v312 = vsel %vm280, %v305, 0.0
        %313 = vadd.xlane.f32.xlu0 %v312
        %v314 = vpop.xlane.xlu0 %313
        %v315 = vmul.f32 %v308, %v296
        %v316 = vmul.f32 %v311, %v296
        %v317 = vmul.f32 %v314, %v296
        %v318 = vadd.f32 %v315, 1e-05
        %v319 = vadd.f32 %v316, 1e-05
        %v320 = vadd.f32 %v317, 1e-05
        %v321 = vrsqrt.pop %v318
        %v322 = vmul.f32 %v321, %v318
        %v323 = vmul.f32 %v322, %v321
        %v324 = vmul.f32 0.5, %v323
        %v325 = vsub.f32 1.5, %v324
        %v326 = vmul.f32 %v321, %v325
        %vm327 = vweird.f32 %v318
        %vm328 = vweird.f32 %v321
        %vm329 = vmor %vm327, %vm328
        %v330 = vsel %vm329, %v321, %v326
        %v331 = vrsqrt.pop %v319
        %v332 = vmul.f32 %v331, %v319
        %v333 = vmul.f32 %v332, %v331
        %v334 = vmul.f32 0.5, %v333
        %v335 = vsub.f32 1.5, %v334
        %v336 = vmul.f32 %v331, %v335
        %vm337 = vweird.f32 %v319
        %vm338 = vweird.f32 %v331
        %vm339 = vmor %vm337, %vm338
        %v340 = vsel %vm339, %v331, %v336
        %v341 = vrsqrt.pop %v320
        %v342 = vmul.f32 %v341, %v320
        %v343 = vmul.f32 %v342, %v341
        %v344 = vmul.f32 0.5, %v343
        %v345 = vsub.f32 1.5, %v344
        %v346 = vmul.f32 %v341, %v345
        %vm347 = vweird.f32 %v320
        %vm348 = vweird.f32 %v341
        %vm349 = vmor %vm347, %vm348
        %v350 = vsel %vm349, %v341, %v346
        %v351 = vmul.f32 %v300, %v330
        %v352 = vmul.f32 %v301, %v340
        %v353 = vmul.f32 %v302, %v350
        %v354 = vld [vmem:[%s1] sm:$0xff]
        %v355 = vld [vmem:[%s1 + $0x8] sm:$0xff]
        %v356 = vld [vmem:[%s1 + $0x10] sm:$0xff]
        %v357 = vmul.f32 %v351, %v354
        %v358 = vmul.f32 %v352, %v355
        %v359 = vmul.f32 %v353, %v356
        %v360 = vld [vmem:[%s2] sm:$0xff]
        %v361 = vld [vmem:[%s2 + $0x8] sm:$0xff]
        %v362 = vld [vmem:[%s2 + $0x10] sm:$0xff]
        %v363 = vadd.f32 %v357, %v360
        %v364 = vadd.f32 %v358, %v361
        %v365 = vadd.f32 %v359, %v362
        %v366 = vld [vmem:[%s3] sm:$0xff]
        %v367 = vld [vmem:[%s3 + $0x8] sm:$0xff]
        %v368 = vld [vmem:[%s3 + $0x10] sm:$0xff]
        %v369 = vld [vmem:[%s3 + $0x18] sm:$0xff]
        %v370 = vld [vmem:[%s3 + $0x20] sm:$0xff]
        %v371 = vld [vmem:[%s3 + $0x28] sm:$0xff]
        %v372 = vld [vmem:[%s3 + $0x30] sm:$0xff]
        %v373 = vld [vmem:[%s3 + $0x38] sm:$0xff]
        %v374 = vld [vmem:[%s3 + $0x40] sm:$0xff]
        %v375 = vld [vmem:[%s3 + $0x48] sm:$0xff]
        %v376 = vld [vmem:[%s3 + $0x50] sm:$0xff]
        %v377 = vld [vmem:[%s3 + $0x58] sm:$0xff]
        %v378 = vld [vmem:[%s3 + $0x60] sm:$0xff]
        %v379 = vld [vmem:[%s3 + $0x68] sm:$0xff]
        %v380 = vld [vmem:[%s3 + $0x70] sm:$0xff]
        %v381 = vld [vmem:[%s3 + $0x78] sm:$0xff]
        %v383 = vsel %vm280, %v365, 0
        %385 = vmatpush.msra.mxu0 0.0
        %386 = vmatpush.msra.mxu0 0.0
        %387 = vmatpush.msra.mxu0 0.0
        %388 = vmatpush.msra.mxu0 0.0
        %389 = vmatpush.msra.mxu0 0.0
        %390 = vmatpush.msra.mxu0 0.0
        %391 = vmatpush.msra.mxu0 0.0
        %392 = vmatpush.msra.mxu0 0.0
        %393 = vmatpush.msra.mxu0 0.0
        %394 = vmatpush.msra.mxu0 0.0
        %395 = vmatpush.msra.mxu0 0.0
        %396 = vmatpush.msra.mxu0 0.0
        %397 = vmatpush.msra.mxu0 %v369
        %398 = vmatpush.msra.mxu0 %v368
        %399 = vmatpush.msra.mxu0 %v367
        %400 = vmatpush.msra.mxu0 %v366
        %401 = vmatmul.f32.gmra.mxu0 %v383
        %v402 = vpop.f32.mrf.mxu0
        %v403 = vadd.f32 0.0, %v402
        %404 = vdwg.mxu0
        %405 = vmatpush.msra.mxu0 0.0
        %406 = vmatpush.msra.mxu0 0.0
        %407 = vmatpush.msra.mxu0 0.0
        %408 = vmatpush.msra.mxu0 0.0
        %409 = vmatpush.msra.mxu0 0.0
        %410 = vmatpush.msra.mxu0 0.0
        %411 = vmatpush.msra.mxu0 0.0
        %412 = vmatpush.msra.mxu0 0.0
        %413 = vmatpush.msra.mxu0 0.0
        %414 = vmatpush.msra.mxu0 0.0
        %415 = vmatpush.msra.mxu0 0.0
        %416 = vmatpush.msra.mxu0 0.0
        %417 = vmatpush.msra.mxu0 %v373
        %418 = vmatpush.msra.mxu0 %v372
        %419 = vmatpush.msra.mxu0 %v371
        %420 = vmatpush.msra.mxu0 %v370
        %421 = vmatmul.f32.gmra.mxu0 %v383
        %v422 = vpop.f32.mrf.mxu0
        %v423 = vadd.f32 0.0, %v422
        %424 = vdwg.mxu0
        %425 = vmatpush.msra.mxu0 0.0
        %426 = vmatpush.msra.mxu0 0.0
        %427 = vmatpush.msra.mxu0 0.0
        %428 = vmatpush.msra.mxu0 0.0
        %429 = vmatpush.msra.mxu0 0.0
        %430 = vmatpush.msra.mxu0 0.0
        %431 = vmatpush.msra.mxu0 0.0
        %432 = vmatpush.msra.mxu0 0.0
        %433 = vmatpush.msra.mxu0 0.0
        %434 = vmatpush.msra.mxu0 0.0
        %435 = vmatpush.msra.mxu0 0.0
        %436 = vmatpush.msra.mxu0 0.0
        %437 = vmatpush.msra.mxu0 %v377
        %438 = vmatpush.msra.mxu0 %v376
        %439 = vmatpush.msra.mxu0 %v375
        %440 = vmatpush.msra.mxu0 %v374
        %441 = vmatmul.f32.gmra.mxu0 %v383
        %v442 = vpop.f32.mrf.mxu0
        %v443 = vadd.f32 0.0, %v442
        %444 = vdwg.mxu0
        %445 = vmatpush.msra.mxu0 0.0
        %446 = vmatpush.msra.mxu0 0.0
        %447 = vmatpush.msra.mxu0 0.0
        %448 = vmatpush.msra.mxu0 0.0
        %449 = vmatpush.msra.mxu0 0.0
        %450 = vmatpush.msra.mxu0 0.0
        %451 = vmatpush.msra.mxu0 0.0
        %452 = vmatpush.msra.mxu0 0.0
        %453 = vmatpush.msra.mxu0 0.0
        %454 = vmatpush.msra.mxu0 0.0
        %455 = vmatpush.msra.mxu0 0.0
        %456 = vmatpush.msra.mxu0 0.0
        %457 = vmatpush.msra.mxu0 %v381
        %458 = vmatpush.msra.mxu0 %v380
        %459 = vmatpush.msra.mxu0 %v379
        %460 = vmatpush.msra.mxu0 %v378
        %461 = vmatmul.f32.gmra.mxu0 %v383
        %v462 = vpop.f32.mrf.mxu0
        %v463 = vadd.f32 0.0, %v462
        %464 = vdwg.mxu0
        %v465 = vld [vmem:[%s4] sm:$0xff]
        %v466 = vld [vmem:[%s4 + $0x8] sm:$0xff]
        %v467 = vld [vmem:[%s4 + $0x10] sm:$0xff]
        %v468 = vld [vmem:[%s4 + $0x18] sm:$0xff]
        %v469 = vld [vmem:[%s4 + $0x20] sm:$0xff]
        %v470 = vld [vmem:[%s4 + $0x28] sm:$0xff]
        %v471 = vld [vmem:[%s4 + $0x30] sm:$0xff]
        %v472 = vld [vmem:[%s4 + $0x38] sm:$0xff]
        %v473 = vld [vmem:[%s4 + $0x40] sm:$0xff]
        %v474 = vld [vmem:[%s4 + $0x48] sm:$0xff]
        %v475 = vld [vmem:[%s4 + $0x50] sm:$0xff]
        %v476 = vld [vmem:[%s4 + $0x58] sm:$0xff]
        %v477 = vld [vmem:[%s4 + $0x60] sm:$0xff]
        %v478 = vld [vmem:[%s4 + $0x68] sm:$0xff]
        %v479 = vld [vmem:[%s4 + $0x70] sm:$0xff]
        %v480 = vld [vmem:[%s4 + $0x78] sm:$0xff]
        %v482 = vsel %vm280, %v363, 0
        %v485 = vsel %vm280, %v364, 0
        %487 = vmatpush.msra.mxu0 0.0
        %488 = vmatpush.msra.mxu0 0.0
        %489 = vmatpush.msra.mxu0 0.0
        %490 = vmatpush.msra.mxu0 0.0
        %491 = vmatpush.msra.mxu0 0.0
        %492 = vmatpush.msra.mxu0 0.0
        %493 = vmatpush.msra.mxu0 0.0
        %494 = vmatpush.msra.mxu0 0.0
        %495 = vmatpush.msra.mxu0 0.0
        %496 = vmatpush.msra.mxu0 0.0
        %497 = vmatpush.msra.mxu0 0.0
        %498 = vmatpush.msra.mxu0 0.0
        %499 = vmatpush.msra.mxu0 %v468
        %500 = vmatpush.msra.mxu0 %v467
        %501 = vmatpush.msra.mxu0 %v466
        %502 = vmatpush.msra.mxu0 %v465
        %503 = vmatmul.f32.gmra.mxu0 %v482
        %v504 = vpop.f32.mrf.mxu0
        %v505 = vadd.f32 0.0, %v504
        %506 = vmatmul.f32.gmra.mxu0 %v485
        %v507 = vpop.f32.mrf.mxu0
        %v508 = vadd.f32 0.0, %v507
        %509 = vmatmul.f32.gmra.mxu0 %v383
        %v510 = vpop.f32.mrf.mxu0
        %v511 = vadd.f32 0.0, %v510
        %512 = vdwg.mxu0
        %513 = vmatpush.msra.mxu0 0.0
        %514 = vmatpush.msra.mxu0 0.0
        %515 = vmatpush.msra.mxu0 0.0
        %516 = vmatpush.msra.mxu0 0.0
        %517 = vmatpush.msra.mxu0 0.0
        %518 = vmatpush.msra.mxu0 0.0
        %519 = vmatpush.msra.mxu0 0.0
        %520 = vmatpush.msra.mxu0 0.0
        %521 = vmatpush.msra.mxu0 0.0
        %522 = vmatpush.msra.mxu0 0.0
        %523 = vmatpush.msra.mxu0 0.0
        %524 = vmatpush.msra.mxu0 0.0
        %525 = vmatpush.msra.mxu0 %v472
        %526 = vmatpush.msra.mxu0 %v471
        %527 = vmatpush.msra.mxu0 %v470
        %528 = vmatpush.msra.mxu0 %v469
        %529 = vmatmul.f32.gmra.mxu0 %v482
        %v530 = vpop.f32.mrf.mxu0
        %v531 = vadd.f32 0.0, %v530
        %532 = vmatmul.f32.gmra.mxu0 %v485
        %v533 = vpop.f32.mrf.mxu0
        %v534 = vadd.f32 0.0, %v533
        %535 = vmatmul.f32.gmra.mxu0 %v383
        %v536 = vpop.f32.mrf.mxu0
        %v537 = vadd.f32 0.0, %v536
        %538 = vdwg.mxu0
        %539 = vmatpush.msra.mxu0 0.0
        %540 = vmatpush.msra.mxu0 0.0
        %541 = vmatpush.msra.mxu0 0.0
        %542 = vmatpush.msra.mxu0 0.0
        %543 = vmatpush.msra.mxu0 0.0
        %544 = vmatpush.msra.mxu0 0.0
        %545 = vmatpush.msra.mxu0 0.0
        %546 = vmatpush.msra.mxu0 0.0
        %547 = vmatpush.msra.mxu0 0.0
        %548 = vmatpush.msra.mxu0 0.0
        %549 = vmatpush.msra.mxu0 0.0
        %550 = vmatpush.msra.mxu0 0.0
        %551 = vmatpush.msra.mxu0 %v476
        %552 = vmatpush.msra.mxu0 %v475
        %553 = vmatpush.msra.mxu0 %v474
        %554 = vmatpush.msra.mxu0 %v473
        %555 = vmatmul.f32.gmra.mxu0 %v482
        %v556 = vpop.f32.mrf.mxu0
        %v557 = vadd.f32 0.0, %v556
        %558 = vmatmul.f32.gmra.mxu0 %v485
        %v559 = vpop.f32.mrf.mxu0
        %v560 = vadd.f32 0.0, %v559
        %561 = vmatmul.f32.gmra.mxu0 %v383
        %v562 = vpop.f32.mrf.mxu0
        %v563 = vadd.f32 0.0, %v562
        %564 = vdwg.mxu0
        %565 = vmatpush.msra.mxu0 0.0
        %566 = vmatpush.msra.mxu0 0.0
        %567 = vmatpush.msra.mxu0 0.0
        %568 = vmatpush.msra.mxu0 0.0
        %569 = vmatpush.msra.mxu0 0.0
        %570 = vmatpush.msra.mxu0 0.0
        %571 = vmatpush.msra.mxu0 0.0
        %572 = vmatpush.msra.mxu0 0.0
        %573 = vmatpush.msra.mxu0 0.0
        %574 = vmatpush.msra.mxu0 0.0
        %575 = vmatpush.msra.mxu0 0.0
        %576 = vmatpush.msra.mxu0 0.0
        %577 = vmatpush.msra.mxu0 %v480
        %578 = vmatpush.msra.mxu0 %v479
        %579 = vmatpush.msra.mxu0 %v478
        %580 = vmatpush.msra.mxu0 %v477
        %581 = vmatmul.f32.gmra.mxu0 %v482
        %v582 = vpop.f32.mrf.mxu0
        %v583 = vadd.f32 0.0, %v582
        %584 = vmatmul.f32.gmra.mxu0 %v485
        %v585 = vpop.f32.mrf.mxu0
        %v586 = vadd.f32 0.0, %v585
        %587 = vmatmul.f32.gmra.mxu0 %v383
        %v588 = vpop.f32.mrf.mxu0
        %v589 = vadd.f32 0.0, %v588
        %590 = vdwg.mxu0
        %v591 = vld [vmem:[%s5] sm:$0xff]
        %v592 = vld [vmem:[%s5 + $0x8] sm:$0xff]
        %v593 = vld [vmem:[%s5 + $0x10] sm:$0xff]
        %v594 = vld [vmem:[%s5 + $0x18] sm:$0xff]
        %v595 = vld [vmem:[%s5 + $0x20] sm:$0xff]
        %v596 = vld [vmem:[%s5 + $0x28] sm:$0xff]
        %v597 = vld [vmem:[%s5 + $0x30] sm:$0xff]
        %v598 = vld [vmem:[%s5 + $0x38] sm:$0xff]
        %v599 = vld [vmem:[%s5 + $0x40] sm:$0xff]
        %v600 = vld [vmem:[%s5 + $0x48] sm:$0xff]
        %v601 = vld [vmem:[%s5 + $0x50] sm:$0xff]
        %v602 = vld [vmem:[%s5 + $0x58] sm:$0xff]
        %v603 = vld [vmem:[%s5 + $0x60] sm:$0xff]
        %v604 = vld [vmem:[%s5 + $0x68] sm:$0xff]
        %v605 = vld [vmem:[%s5 + $0x70] sm:$0xff]
        %v606 = vld [vmem:[%s5 + $0x78] sm:$0xff]
        %607 = vmatpush.msra.mxu0 0.0
        %608 = vmatpush.msra.mxu0 0.0
        %609 = vmatpush.msra.mxu0 0.0
        %610 = vmatpush.msra.mxu0 0.0
        %611 = vmatpush.msra.mxu0 0.0
        %612 = vmatpush.msra.mxu0 0.0
        %613 = vmatpush.msra.mxu0 0.0
        %614 = vmatpush.msra.mxu0 0.0
        %615 = vmatpush.msra.mxu0 0.0
        %616 = vmatpush.msra.mxu0 0.0
        %617 = vmatpush.msra.mxu0 0.0
        %618 = vmatpush.msra.mxu0 0.0
        %619 = vmatpush.msra.mxu0 %v594
        %620 = vmatpush.msra.mxu0 %v593
        %621 = vmatpush.msra.mxu0 %v592
        %622 = vmatpush.msra.mxu0 %v591
        %623 = vmatmul.f32.gmra.mxu0 %v482
        %v624 = vpop.f32.mrf.mxu0
        %v625 = vadd.f32 0.0, %v624
        %626 = vmatmul.f32.gmra.mxu0 %v485
        %v627 = vpop.f32.mrf.mxu0
        %v628 = vadd.f32 0.0, %v627
        %629 = vmatmul.f32.gmra.mxu0 %v383
        %v630 = vpop.f32.mrf.mxu0
        %v631 = vadd.f32 0.0, %v630
        %632 = vdwg.mxu0
        %633 = vmatpush.msra.mxu0 0.0
        %634 = vmatpush.msra.mxu0 0.0
        %635 = vmatpush.msra.mxu0 0.0
        %636 = vmatpush.msra.mxu0 0.0
        %637 = vmatpush.msra.mxu0 0.0
        %638 = vmatpush.msra.mxu0 0.0
        %639 = vmatpush.msra.mxu0 0.0
        %640 = vmatpush.msra.mxu0 0.0
        %641 = vmatpush.msra.mxu0 0.0
        %642 = vmatpush.msra.mxu0 0.0
        %643 = vmatpush.msra.mxu0 0.0
        %644 = vmatpush.msra.mxu0 0.0
        %645 = vmatpush.msra.mxu0 %v598
        %646 = vmatpush.msra.mxu0 %v597
        %647 = vmatpush.msra.mxu0 %v596
        %648 = vmatpush.msra.mxu0 %v595
        %649 = vmatmul.f32.gmra.mxu0 %v482
        %v650 = vpop.f32.mrf.mxu0
        %v651 = vadd.f32 0.0, %v650
        %652 = vmatmul.f32.gmra.mxu0 %v485
        %v653 = vpop.f32.mrf.mxu0
        %v654 = vadd.f32 0.0, %v653
        %655 = vmatmul.f32.gmra.mxu0 %v383
        %v656 = vpop.f32.mrf.mxu0
        %v657 = vadd.f32 0.0, %v656
        %658 = vdwg.mxu0
        %659 = vmatpush.msra.mxu0 0.0
        %660 = vmatpush.msra.mxu0 0.0
        %661 = vmatpush.msra.mxu0 0.0
        %662 = vmatpush.msra.mxu0 0.0
        %663 = vmatpush.msra.mxu0 0.0
        %664 = vmatpush.msra.mxu0 0.0
        %665 = vmatpush.msra.mxu0 0.0
        %666 = vmatpush.msra.mxu0 0.0
        %667 = vmatpush.msra.mxu0 0.0
        %668 = vmatpush.msra.mxu0 0.0
        %669 = vmatpush.msra.mxu0 0.0
        %670 = vmatpush.msra.mxu0 0.0
        %671 = vmatpush.msra.mxu0 %v602
        %672 = vmatpush.msra.mxu0 %v601
        %673 = vmatpush.msra.mxu0 %v600
        %674 = vmatpush.msra.mxu0 %v599
        %675 = vmatmul.f32.gmra.mxu0 %v482
        %v676 = vpop.f32.mrf.mxu0
        %v677 = vadd.f32 0.0, %v676
        %678 = vmatmul.f32.gmra.mxu0 %v485
        %v679 = vpop.f32.mrf.mxu0
        %v680 = vadd.f32 0.0, %v679
        %681 = vmatmul.f32.gmra.mxu0 %v383
        %v682 = vpop.f32.mrf.mxu0
        %v683 = vadd.f32 0.0, %v682
        %684 = vdwg.mxu0
        %685 = vmatpush.msra.mxu0 0.0
        %686 = vmatpush.msra.mxu0 0.0
        %687 = vmatpush.msra.mxu0 0.0
        %688 = vmatpush.msra.mxu0 0.0
        %689 = vmatpush.msra.mxu0 0.0
        %690 = vmatpush.msra.mxu0 0.0
        %691 = vmatpush.msra.mxu0 0.0
        %692 = vmatpush.msra.mxu0 0.0
        %693 = vmatpush.msra.mxu0 0.0
        %694 = vmatpush.msra.mxu0 0.0
        %695 = vmatpush.msra.mxu0 0.0
        %696 = vmatpush.msra.mxu0 0.0
        %697 = vmatpush.msra.mxu0 %v606
        %698 = vmatpush.msra.mxu0 %v605
        %699 = vmatpush.msra.mxu0 %v604
        %700 = vmatpush.msra.mxu0 %v603
        %701 = vmatmul.f32.gmra.mxu0 %v482
        %v702 = vpop.f32.mrf.mxu0
        %v703 = vadd.f32 0.0, %v702
        %704 = vmatmul.f32.gmra.mxu0 %v485
        %v705 = vpop.f32.mrf.mxu0
        %v706 = vadd.f32 0.0, %v705
        %707 = vmatmul.f32.gmra.mxu0 %v383
        %v708 = vpop.f32.mrf.mxu0
        %v709 = vadd.f32 0.0, %v708
        %710 = vdwg.mxu0
        %vm711 = vcmask 64512
        %v713 = vsel %vm711, %v403, 0
        %v716 = vsel %vm711, %v505, 0
        %v719 = vsel %vm711, %v508, 0
        %v722 = vsel %vm711, %v511, 0
        %724 = vmatpush.xpose.msra.mxu0 0.0
        %725 = vmatpush.xpose.msra.mxu0 0.0
        %726 = vmatpush.xpose.msra.mxu0 0.0
        %727 = vmatpush.xpose.msra.mxu0 0.0
        %728 = vmatpush.xpose.msra.mxu0 0.0
        %729 = vmatpush.xpose.msra.mxu0 0.0
        %730 = vmatpush.xpose.msra.mxu0 0.0
        %731 = vmatpush.xpose.msra.mxu0 0.0
        %732 = vmatpush.xpose.msra.mxu0 0.0
        %733 = vmatpush.xpose.msra.mxu0 0.0
        %734 = vmatpush.xpose.msra.mxu0 0.0
        %735 = vmatpush.xpose.msra.mxu0 0.0
        %736 = vmatpush.xpose.msra.mxu0 0.0
        %737 = vmatpush.xpose.msra.mxu0 %v722
        %738 = vmatpush.xpose.msra.mxu0 %v719
        %739 = vmatpush.xpose.msra.mxu0 %v716
        %740 = vmatmul.f32.gmra.mxu0 %v713
        %v741 = vpop.f32.mrf.mxu0
        %v742 = vadd.f32 0.0, %v741
        %743 = vdwg.mxu0
        %v745 = vsel %vm711, %v423, 0
        %v748 = vsel %vm711, %v531, 0
        %v751 = vsel %vm711, %v534, 0
        %v754 = vsel %vm711, %v537, 0
        %756 = vmatpush.xpose.msra.mxu0 0.0
        %757 = vmatpush.xpose.msra.mxu0 0.0
        %758 = vmatpush.xpose.msra.mxu0 0.0
        %759 = vmatpush.xpose.msra.mxu0 0.0
        %760 = vmatpush.xpose.msra.mxu0 0.0
        %761 = vmatpush.xpose.msra.mxu0 0.0
        %762 = vmatpush.xpose.msra.mxu0 0.0
        %763 = vmatpush.xpose.msra.mxu0 0.0
        %764 = vmatpush.xpose.msra.mxu0 0.0
        %765 = vmatpush.xpose.msra.mxu0 0.0
        %766 = vmatpush.xpose.msra.mxu0 0.0
        %767 = vmatpush.xpose.msra.mxu0 0.0
        %768 = vmatpush.xpose.msra.mxu0 0.0
        %769 = vmatpush.xpose.msra.mxu0 %v754
        %770 = vmatpush.xpose.msra.mxu0 %v751
        %771 = vmatpush.xpose.msra.mxu0 %v748
        %772 = vmatmul.f32.gmra.mxu0 %v745
        %v773 = vpop.f32.mrf.mxu0
        %v774 = vadd.f32 0.0, %v773
        %775 = vdwg.mxu0
        %v777 = vsel %vm711, %v443, 0
        %v780 = vsel %vm711, %v557, 0
        %v783 = vsel %vm711, %v560, 0
        %v786 = vsel %vm711, %v563, 0
        %788 = vmatpush.xpose.msra.mxu0 0.0
        %789 = vmatpush.xpose.msra.mxu0 0.0
        %790 = vmatpush.xpose.msra.mxu0 0.0
        %791 = vmatpush.xpose.msra.mxu0 0.0
        %792 = vmatpush.xpose.msra.mxu0 0.0
        %793 = vmatpush.xpose.msra.mxu0 0.0
        %794 = vmatpush.xpose.msra.mxu0 0.0
        %795 = vmatpush.xpose.msra.mxu0 0.0
        %796 = vmatpush.xpose.msra.mxu0 0.0
        %797 = vmatpush.xpose.msra.mxu0 0.0
        %798 = vmatpush.xpose.msra.mxu0 0.0
        %799 = vmatpush.xpose.msra.mxu0 0.0
        %800 = vmatpush.xpose.msra.mxu0 0.0
        %801 = vmatpush.xpose.msra.mxu0 %v786
        %802 = vmatpush.xpose.msra.mxu0 %v783
        %803 = vmatpush.xpose.msra.mxu0 %v780
        %804 = vmatmul.f32.gmra.mxu0 %v777
        %v805 = vpop.f32.mrf.mxu0
        %v806 = vadd.f32 0.0, %v805
        %807 = vdwg.mxu0
        %v809 = vsel %vm711, %v463, 0
        %v812 = vsel %vm711, %v583, 0
        %v815 = vsel %vm711, %v586, 0
        %v818 = vsel %vm711, %v589, 0
        %820 = vmatpush.xpose.msra.mxu0 0.0
        %821 = vmatpush.xpose.msra.mxu0 0.0
        %822 = vmatpush.xpose.msra.mxu0 0.0
        %823 = vmatpush.xpose.msra.mxu0 0.0
        %824 = vmatpush.xpose.msra.mxu0 0.0
        %825 = vmatpush.xpose.msra.mxu0 0.0
        %826 = vmatpush.xpose.msra.mxu0 0.0
        %827 = vmatpush.xpose.msra.mxu0 0.0
        %828 = vmatpush.xpose.msra.mxu0 0.0
        %829 = vmatpush.xpose.msra.mxu0 0.0
        %830 = vmatpush.xpose.msra.mxu0 0.0
        %831 = vmatpush.xpose.msra.mxu0 0.0
        %832 = vmatpush.xpose.msra.mxu0 0.0
        %833 = vmatpush.xpose.msra.mxu0 %v818
        %834 = vmatpush.xpose.msra.mxu0 %v815
        %835 = vmatpush.xpose.msra.mxu0 %v812
        %836 = vmatmul.f32.gmra.mxu0 %v809
        %v837 = vpop.f32.mrf.mxu0
        %v838 = vadd.f32 0.0, %v837
        %839 = vdwg.mxu0
        %vm840 = vcmask 195584
        %v841 = vsel %vm840, %v742, -inf
        %842 = vmax.xlane.f32.xlu0 %v841
        %v843 = vpop.xlane.xlu0 %842
        %v844 = vsel %vm840, %v774, -inf
        %845 = vmax.xlane.f32.xlu0 %v844
        %v846 = vpop.xlane.xlu0 %845
        %v847 = vsel %vm840, %v806, -inf
        %848 = vmax.xlane.f32.xlu0 %v847
        %v849 = vpop.xlane.xlu0 %848
        %v850 = vsel %vm840, %v838, -inf
        %851 = vmax.xlane.f32.xlu0 %v850
        %v852 = vpop.xlane.xlu0 %851
        %v853 = vsub.f32 %v742, %v843
        %v854 = vsub.f32 %v774, %v846
        %v855 = vsub.f32 %v806, %v849
        %v856 = vsub.f32 %v838, %v852
        %v857 = vmul.f32 %v853, 1.442695
        %v858 = vpow.pop %v857
        %v859 = vmul.f32 %v854, 1.442695
        %v860 = vpow.pop %v859
        %v861 = vmul.f32 %v855, 1.442695
        %v862 = vpow.pop %v861
        %v863 = vmul.f32 %v856, 1.442695
        %v864 = vpow.pop %v863
        %v865 = vsel %vm840, %v858, 0.0
        %866 = vadd.xlane.f32.xlu0 %v865
        %v867 = vpop.xlane.xlu0 %866
        %v868 = vsel %vm840, %v860, 0.0
        %869 = vadd.xlane.f32.xlu0 %v868
        %v870 = vpop.xlane.xlu0 %869
        %v871 = vsel %vm840, %v862, 0.0
        %872 = vadd.xlane.f32.xlu0 %v871
        %v873 = vpop.xlane.xlu0 %872
        %v874 = vsel %vm840, %v864, 0.0
        %875 = vadd.xlane.f32.xlu0 %v874
        %v876 = vpop.xlane.xlu0 %875
        %v877 = vrcp.pop %v867
        %v878 = vmul.f32 %v867, %v877
        %v879 = vsub.f32 1.0, %v878
        %v880 = vmul.f32 %v877, %v879
        %v881 = vadd.f32 %v877, %v880
        %vm882 = vweird.f32 %v867
        %vm883 = vweird.f32 %v877
        %vm884 = vmor %vm882, %vm883
        %v885 = vsel %vm884, %v877, %v881
        %v886 = vand.u32 2147483647, %v867
        %vm887 = vcmp.eq.f32.partialorder %v886, 8.507059e+37
        %v888 = vand.u32 %v867, 2147483648
        %v889 = vor.u32 1.1754944e-38, %v888
        %v890 = vsel %vm887, %v889, %v885
        %v891 = vmul.f32 %v858, %v890
        %v892 = vrcp.pop %v870
        %v893 = vmul.f32 %v870, %v892
        %v894 = vsub.f32 1.0, %v893
        %v895 = vmul.f32 %v892, %v894
        %v896 = vadd.f32 %v892, %v895
        %vm897 = vweird.f32 %v870
        %vm898 = vweird.f32 %v892
        %vm899 = vmor %vm897, %vm898
        %v900 = vsel %vm899, %v892, %v896
        %v901 = vand.u32 2147483647, %v870
        %vm902 = vcmp.eq.f32.partialorder %v901, 8.507059e+37
        %v903 = vand.u32 %v870, 2147483648
        %v904 = vor.u32 1.1754944e-38, %v903
        %v905 = vsel %vm902, %v904, %v900
        %v906 = vmul.f32 %v860, %v905
        %v907 = vrcp.pop %v873
        %v908 = vmul.f32 %v873, %v907
        %v909 = vsub.f32 1.0, %v908
        %v910 = vmul.f32 %v907, %v909
        %v911 = vadd.f32 %v907, %v910
        %vm912 = vweird.f32 %v873
        %vm913 = vweird.f32 %v907
        %vm914 = vmor %vm912, %vm913
        %v915 = vsel %vm914, %v907, %v911
        %v916 = vand.u32 2147483647, %v873
        %vm917 = vcmp.eq.f32.partialorder %v916, 8.507059e+37
        %v918 = vand.u32 %v873, 2147483648
        %v919 = vor.u32 1.1754944e-38, %v918
        %v920 = vsel %vm917, %v919, %v915
        %v921 = vmul.f32 %v862, %v920
        %v922 = vrcp.pop %v876
        %v923 = vmul.f32 %v876, %v922
        %v924 = vsub.f32 1.0, %v923
        %v925 = vmul.f32 %v922, %v924
        %v926 = vadd.f32 %v922, %v925
        %vm927 = vweird.f32 %v876
        %vm928 = vweird.f32 %v922
        %vm929 = vmor %vm927, %vm928
        %v930 = vsel %vm929, %v922, %v926
        %v931 = vand.u32 2147483647, %v876
        %vm932 = vcmp.eq.f32.partialorder %v931, 8.507059e+37
        %v933 = vand.u32 %v876, 2147483648
        %v934 = vor.u32 1.1754944e-38, %v933
        %v935 = vsel %vm932, %v934, %v930
        %v936 = vmul.f32 %v864, %v935
        %v938 = vsel %vm840, %v891, 0
        %940 = vmatpush.msra.mxu0 0.0
        %941 = vmatpush.msra.mxu0 0.0
        %942 = vmatpush.msra.mxu0 0.0
        %943 = vmatpush.msra.mxu0 0.0
        %944 = vmatpush.msra.mxu0 0.0
        %945 = vmatpush.msra.mxu0 0.0
        %946 = vmatpush.msra.mxu0 0.0
        %947 = vmatpush.msra.mxu0 0.0
        %948 = vmatpush.msra.mxu0 0.0
        %949 = vmatpush.msra.mxu0 0.0
        %950 = vmatpush.msra.mxu0 0.0
        %951 = vmatpush.msra.mxu0 0.0
        %952 = vmatpush.msra.mxu0 0.0
        %953 = vmatpush.msra.mxu0 %v631
        %954 = vmatpush.msra.mxu0 %v628
        %955 = vmatpush.msra.mxu0 %v625
        %956 = vmatmul.f32.gmra.mxu0 %v938
        %v957 = vpop.f32.mrf.mxu0
        %v958 = vadd.f32 0.0, %v957
        %959 = vdwg.mxu0
        %v961 = vsel %vm840, %v906, 0
        %963 = vmatpush.msra.mxu0 0.0
        %964 = vmatpush.msra.mxu0 0.0
        %965 = vmatpush.msra.mxu0 0.0
        %966 = vmatpush.msra.mxu0 0.0
        %967 = vmatpush.msra.mxu0 0.0
        %968 = vmatpush.msra.mxu0 0.0
        %969 = vmatpush.msra.mxu0 0.0
        %970 = vmatpush.msra.mxu0 0.0
        %971 = vmatpush.msra.mxu0 0.0
        %972 = vmatpush.msra.mxu0 0.0
        %973 = vmatpush.msra.mxu0 0.0
        %974 = vmatpush.msra.mxu0 0.0
        %975 = vmatpush.msra.mxu0 0.0
        %976 = vmatpush.msra.mxu0 %v657
        %977 = vmatpush.msra.mxu0 %v654
        %978 = vmatpush.msra.mxu0 %v651
        %979 = vmatmul.f32.gmra.mxu0 %v961
        %v980 = vpop.f32.mrf.mxu0
        %v981 = vadd.f32 0.0, %v980
        %982 = vdwg.mxu0
        %v984 = vsel %vm840, %v921, 0
        %986 = vmatpush.msra.mxu0 0.0
        %987 = vmatpush.msra.mxu0 0.0
        %988 = vmatpush.msra.mxu0 0.0
        %989 = vmatpush.msra.mxu0 0.0
        %990 = vmatpush.msra.mxu0 0.0
        %991 = vmatpush.msra.mxu0 0.0
        %992 = vmatpush.msra.mxu0 0.0
        %993 = vmatpush.msra.mxu0 0.0
        %994 = vmatpush.msra.mxu0 0.0
        %995 = vmatpush.msra.mxu0 0.0
        %996 = vmatpush.msra.mxu0 0.0
        %997 = vmatpush.msra.mxu0 0.0
        %998 = vmatpush.msra.mxu0 0.0
        %999 = vmatpush.msra.mxu0 %v683
        %1000 = vmatpush.msra.mxu0 %v680
        %1001 = vmatpush.msra.mxu0 %v677
        %1002 = vmatmul.f32.gmra.mxu0 %v984
        %v1003 = vpop.f32.mrf.mxu0
        %v1004 = vadd.f32 0.0, %v1003
        %1005 = vdwg.mxu0
        %v1007 = vsel %vm840, %v936, 0
        %1009 = vmatpush.msra.mxu0 0.0
        %1010 = vmatpush.msra.mxu0 0.0
        %1011 = vmatpush.msra.mxu0 0.0
        %1012 = vmatpush.msra.mxu0 0.0
        %1013 = vmatpush.msra.mxu0 0.0
        %1014 = vmatpush.msra.mxu0 0.0
        %1015 = vmatpush.msra.mxu0 0.0
        %1016 = vmatpush.msra.mxu0 0.0
        %1017 = vmatpush.msra.mxu0 0.0
        %1018 = vmatpush.msra.mxu0 0.0
        %1019 = vmatpush.msra.mxu0 0.0
        %1020 = vmatpush.msra.mxu0 0.0
        %1021 = vmatpush.msra.mxu0 0.0
        %1022 = vmatpush.msra.mxu0 %v709
        %1023 = vmatpush.msra.mxu0 %v706
        %1024 = vmatpush.msra.mxu0 %v703
        %1025 = vmatmul.f32.gmra.mxu0 %v1007
        %v1026 = vpop.f32.mrf.mxu0
        %v1027 = vadd.f32 0.0, %v1026
        %1028 = vdwg.mxu0
        %v1029 = vld [vmem:[%s6] sm:$0xff]
        %v1030 = vld [vmem:[%s6 + $0x8] sm:$0xff]
        %v1031 = vld [vmem:[%s6 + $0x10] sm:$0xff]
        %v1032 = vld [vmem:[%s6 + $0x18] sm:$0xff]
        %v1034 = vsel %vm711, %v958, 0
        %1036 = vmatpush.msra.mxu0 0.0
        %1037 = vmatpush.msra.mxu0 0.0
        %1038 = vmatpush.msra.mxu0 0.0
        %1039 = vmatpush.msra.mxu0 0.0
        %1040 = vmatpush.msra.mxu0 0.0
        %1041 = vmatpush.msra.mxu0 0.0
        %1042 = vmatpush.msra.mxu0 0.0
        %1043 = vmatpush.msra.mxu0 0.0
        %1044 = vmatpush.msra.mxu0 0.0
        %1045 = vmatpush.msra.mxu0 0.0
        %1046 = vmatpush.msra.mxu0 0.0
        %1047 = vmatpush.msra.mxu0 0.0
        %1048 = vmatpush.msra.mxu0 0.0
        %1049 = vmatpush.msra.mxu0 0.0
        %1050 = vmatpush.msra.mxu0 0.0
        %1051 = vmatpush.msra.mxu0 %v1029
        %1052 = vmatmul.f32.gmra.mxu0 %v1034
        %v1053 = vpop.f32.mrf.mxu0
        %v1054 = vadd.f32 0.0, %v1053
        %1055 = vdwg.mxu0
        %v1057 = vsel %vm711, %v981, 0
        %1059 = vmatpush.msra.mxu0 0.0
        %1060 = vmatpush.msra.mxu0 0.0
        %1061 = vmatpush.msra.mxu0 0.0
        %1062 = vmatpush.msra.mxu0 0.0
        %1063 = vmatpush.msra.mxu0 0.0
        %1064 = vmatpush.msra.mxu0 0.0
        %1065 = vmatpush.msra.mxu0 0.0
        %1066 = vmatpush.msra.mxu0 0.0
        %1067 = vmatpush.msra.mxu0 0.0
        %1068 = vmatpush.msra.mxu0 0.0
        %1069 = vmatpush.msra.mxu0 0.0
        %1070 = vmatpush.msra.mxu0 0.0
        %1071 = vmatpush.msra.mxu0 0.0
        %1072 = vmatpush.msra.mxu0 0.0
        %1073 = vmatpush.msra.mxu0 0.0
        %1074 = vmatpush.msra.mxu0 %v1030
        %1075 = vmatmul.f32.gmra.mxu0 %v1057
        %v1076 = vpop.f32.mrf.mxu0
        %v1077 = vadd.f32 0.0, %v1076
        %1078 = vdwg.mxu0
        %v1080 = vsel %vm711, %v1004, 0
        %1082 = vmatpush.msra.mxu0 0.0
        %1083 = vmatpush.msra.mxu0 0.0
        %1084 = vmatpush.msra.mxu0 0.0
        %1085 = vmatpush.msra.mxu0 0.0
        %1086 = vmatpush.msra.mxu0 0.0
        %1087 = vmatpush.msra.mxu0 0.0
        %1088 = vmatpush.msra.mxu0 0.0
        %1089 = vmatpush.msra.mxu0 0.0
        %1090 = vmatpush.msra.mxu0 0.0
        %1091 = vmatpush.msra.mxu0 0.0
        %1092 = vmatpush.msra.mxu0 0.0
        %1093 = vmatpush.msra.mxu0 0.0
        %1094 = vmatpush.msra.mxu0 0.0
        %1095 = vmatpush.msra.mxu0 0.0
        %1096 = vmatpush.msra.mxu0 0.0
        %1097 = vmatpush.msra.mxu0 %v1031
        %1098 = vmatmul.f32.gmra.mxu0 %v1080
        %v1099 = vpop.f32.mrf.mxu0
        %v1100 = vadd.f32 0.0, %v1099
        %1101 = vdwg.mxu0
        %v1103 = vsel %vm711, %v1027, 0
        %1105 = vmatpush.msra.mxu0 0.0
        %1106 = vmatpush.msra.mxu0 0.0
        %1107 = vmatpush.msra.mxu0 0.0
        %1108 = vmatpush.msra.mxu0 0.0
        %1109 = vmatpush.msra.mxu0 0.0
        %1110 = vmatpush.msra.mxu0 0.0
        %1111 = vmatpush.msra.mxu0 0.0
        %1112 = vmatpush.msra.mxu0 0.0
        %1113 = vmatpush.msra.mxu0 0.0
        %1114 = vmatpush.msra.mxu0 0.0
        %1115 = vmatpush.msra.mxu0 0.0
        %1116 = vmatpush.msra.mxu0 0.0
        %1117 = vmatpush.msra.mxu0 0.0
        %1118 = vmatpush.msra.mxu0 0.0
        %1119 = vmatpush.msra.mxu0 0.0
        %1120 = vmatpush.msra.mxu0 %v1032
        %1121 = vmatmul.f32.gmra.mxu0 %v1103
        %v1122 = vpop.f32.mrf.mxu0
        %v1123 = vadd.f32 0.0, %v1122
        %1124 = vdwg.mxu0
        %v1125 = vadd.f32 %v1054, %v1077
        %v1126 = vadd.f32 %v1125, %v1100
        %v1127 = vadd.f32 %v1126, %v1123
        %v1129 = vrot.slane %v1127, 1
        %1130 = vrot.lane.b32.xlu0 %v1129, 32
        %v1131 = vpop.permute.xlu0 %1130
        %v1133 = vrot.slane %v1127, 2
        %1134 = vrot.lane.b32.xlu0 %v1133, 64
        %v1135 = vpop.permute.xlu0 %1134
        %v1137 = vrot.slane %v1127, 3
        %1138 = vrot.lane.b32.xlu0 %v1137, 96
        %v1139 = vpop.permute.xlu0 %1138
        %v1141 = vrot.slane %v1127, 4
        %v1143 = vrot.slane %v1127, 5
        %1144 = vrot.lane.b32.xlu0 %v1143, 32
        %v1145 = vpop.permute.xlu0 %1144
        %v1147 = vrot.slane %v1127, 6
        %1148 = vrot.lane.b32.xlu0 %v1147, 64
        %v1149 = vpop.permute.xlu0 %1148
        %v1151 = vrot.slane %v1127, 7
        %1152 = vrot.lane.b32.xlu0 %v1151, 96
        %v1153 = vpop.permute.xlu0 %1152
        %v1155 = vsel %vm280, %v1127, %v1131
        %vm1156 = vcmask 523264
        %v1157 = vsel %vm1156, %v1155, %v1135
        %vm1158 = vcmask 785408
        %v1159 = vsel %vm1158, %v1157, %v1139
        %v1160 = vsel %vm280, %v1141, %v1145
        %v1161 = vsel %vm1156, %v1160, %v1149
        %v1162 = vsel %vm1158, %v1161, %v1153
        %v1165 = vrot.slane %v1162, 7
        %vm1166 = vcmask 1040384
        %v1167 = vsel %vm1166, %v1159, %v1165
        %v1169 = vlaneseq
        %vm1170 = vcmp.ge.s32.totalorder %v1169, 0
        %vm1171 = vcmp.lt.s32.totalorder %v1169, 256
        %vm1172 = vmand %vm1170, %vm1171
        %1173 = vst.msk [vmem:[%s271] sm:$0x3] %vm1172, %v1167
        %s1174 = sand.u32 %s181, 1
        %s1175 = scalar_lea.sflag [#allocation3], %s1174
        %s1176 = sand.u32 %s181, 1
        %s1177 = smul.addr %s1176, 2
        %s1178 = scalar_lea.vmem [#allocation2], %s1177
        // Predicated region
        $region49: #{tpu_custom_call.1} parent=47 // pred_check
          %p1179 = pneg %p191
        $region50: #{tpu_custom_call.1} parent=47 // pred_check_branch
          %1181 = sbr.rel (%p1179) target = $region52
        $region51: #{tpu_custom_call.1} parent=47 // pred_region
          %1183 = vsyncadd %s1175, 0
          %s1184 = smul.addr %s21, 2
          %s1185 = scalar_lea.hbm %s7, %s1184
          %s1187 = sshll.u32 %s1178, 4
          %s1188 = int_to_ptr.vmem [resolvable:$true] %s1187
          %s1189 = sshll.u32 %s1185, 4
          %s1190 = int_to_ptr.hbm [resolvable:$true] %s1189
          %1192 = dma.vmem_to_hbm [thread:$0]  %s1188, 32, %s1190, %s1175
        $region52: #{tpu_custom_call.1} parent=47 // pred_fallthru
          _
      $region48: #{tpu_custom_call.1} parent=5 // pred_fallthru
        _
      %p1193 = scmp.le.s32.totalorder 2, %s16
      // Predicated region
      $region53: #{tpu_custom_call.1} parent=5 // pred_check
        %p1194 = pneg %p1193
      $region54: #{tpu_custom_call.1} parent=5 // pred_check_branch
        %1196 = sbr.rel (%p1194) target = $region56
      $region55: #{tpu_custom_call.1} parent=5 // pred_region
        %s1197 = ssub.s32 %s16, 2
        // Predicated region
        $region57: #{tpu_custom_call.1} parent=55 // pred_check
          %p1198 = pneg %p197
        $region58: #{tpu_custom_call.1} parent=55 // pred_check_branch
          %1200 = sbr.rel (%p1198) target = $region60
        $region59: #{tpu_custom_call.1} parent=55 // pred_region
          %s1201 = sand.u32 %s182, 1
          %s1202 = scalar_lea.sflag [#allocation3], %s1201
          %s1203 = sand.u32 %s182, 1
          %s1204 = smul.addr %s1203, 2
          %s1205 = scalar_lea.vmem [#allocation2], %s1204
          %1207 = dma.done %s1202, 32
        $region60: #{tpu_custom_call.1} parent=55 // pred_fallthru
          _
      $region56: #{tpu_custom_call.1} parent=5 // pred_fallthru
        _
    $region6: #{tpu_custom_call.1} parent=1 // loop_footer
      %s20 = sadd.s32 1, %s16
    $region7: #{tpu_custom_call.1} parent=1 // loop_footer_branch
      %15 = sbr.rel target = $region3
    $region8: #{tpu_custom_call.1} parent=1 // loop_exit
      _
    %1208 = vsyncpa [#allocation3], 1
    %s1209 = scalar_lea.sflag [#allocation3], 1
    %1210 = vsyncpa %s1209, 1

</llo_original>
